<compile_context>
chip_gen: v5e
topology: v5e:2x2
jax: 0.10.0
libtpu: 0.0.40
codegen_flags: <defaults>
</compile_context>

<pallas_src>
import functools

import jax
import jax.numpy as jnp
from jax.experimental import pallas as pl
from jax.experimental.pallas import tpu as pltpu


def _gconv_kernel(x_ref, w_ref, b_ref, o_ref, *, out_feat):
    """One row-tile: fused dual-linear + per-branch LeakyReLU(0.2) + sum."""
    x = x_ref[...]                                   # [row_tile, in_feat]
    b = b_ref[...]                                   # [1, 2*out_feat], already f32
    # Single MXU matmul covering both branches; f32 accumulation.
    y = jnp.dot(x, w_ref[...], preferred_element_type=jnp.float32) + b
    ya = y[:, :out_feat]                             # a_fc branch
    yu = y[:, out_feat:]                             # u_fc branch

    def lrelu(v):                                    # LeakyReLU(negative_slope=0.2)
        return jnp.where(v > 0, v, 0.2 * v)

    o_ref[...] = (lrelu(ya) + lrelu(yu)).astype(o_ref.dtype)


def _round_up(v, m):
    return ((v + m - 1) // m) * m


def graph_conv_operation(A, x, wa, ba, wu, bu, norm=True, *, row_tile=None):
    """Pallas implementation of GraphConvOperation.forward.

    A, norm are accepted for API parity but unused (matches the PyTorch code).

    x:  [B, N, in_feat]
    wa: [out_feat, in_feat]  (PyTorch nn.Linear weight layout)
    ba: [out_feat]
    wu: [out_feat, in_feat]
    bu: [out_feat]
    returns [B, N, out_feat]
    """
    del A, norm  # unused in the reference forward pass
    B, N, in_feat = x.shape
    out_feat = wa.shape[0]
    dtype = x.dtype

    M = B * N
    sub = 16 if dtype == jnp.bfloat16 else 8  # sublane packing for the row axis

    if row_tile is None:
        # Real tile: big enough to amortize the ~0.35us/step grid overhead and
        # approach the HBM roofline, small enough to stay far below the scoped
        # VMEM budget even on v7x (64 MiB physical) with double-buffered x/out.
        row_tile = min(512, _round_up(M, sub))
        # Prefer >= 2 grid steps so the "parallel" axis can shard across both
        # TensorCores on v7x and the pipeline actually overlaps DMA/compute.
        if _round_up(M, row_tile) // row_tile < 2 and M > sub:
            row_tile = max(sub, (_round_up(M, sub) // 2 // sub) * sub)
    # Round any caller-supplied tile down to a sublane multiple (keeps
    # vld/vst unmasked along the sublane axis).
    row_tile = max(sub, (row_tile // sub) * sub)

    M_pad = _round_up(M, row_tile)
    x2d = x.reshape(M, in_feat)
    if M_pad != M:
        x2d = jnp.pad(x2d, ((0, M_pad - M), (0, 0)))

    # Fuse the two branches: one concatenated weight matrix and bias row.
    w_cat = jnp.concatenate([wa.T, wu.T], axis=1).astype(dtype)      # [in, 2*out]
    b_cat = (
        jnp.concatenate([ba, bu]).astype(jnp.float32).reshape(1, 2 * out_feat)
    )

    grid = (M_pad // row_tile,)
    kernel = functools.partial(_gconv_kernel, out_feat=out_feat)

    # NOTE: weights/bias use a constant index_map, so their tiles are fetched
    # once and reused across the whole grid; at these sizes (a few KiB) the
    # extra pipeline buffer is negligible, so we leave the default buffering.
    out2d = pl.pallas_call(
        kernel,
        out_shape=jax.ShapeDtypeStruct((M_pad, out_feat), dtype),
        grid_spec=pltpu.PrefetchScalarGridSpec(
            num_scalar_prefetch=0,
            grid=grid,
            in_specs=[
                pl.BlockSpec((row_tile, in_feat), lambda i: (i, 0)),      # x rows
                pl.BlockSpec((in_feat, 2 * out_feat), lambda i: (0, 0)),  # [Wa^T | Wu^T]
                pl.BlockSpec((1, 2 * out_feat), lambda i: (0, 0)),        # [ba | bu] (f32)
            ],
            out_specs=pl.BlockSpec((row_tile, out_feat), lambda i: (i, 0)),
        ),
        compiler_params=pltpu.CompilerParams(
            dimension_semantics=("parallel",),
        ),
    )(x2d, w_cat, b_cat)

    if M_pad != M:
        out2d = out2d[:M]
    return out2d.reshape(B, N, out_feat)


def _reference(x, wa, ba, wu, bu):
    ax = jnp.einsum("bnf,of->bno", x, wa) + ba
    ux = jnp.einsum("bnf,of->bno", x, wu) + bu
    lrelu = lambda v: jnp.where(v > 0, v, 0.2 * v)
    return lrelu(ax) + lrelu(ux)


if __name__ == "__main__":
    # Small shapes consistent with the module: batch=2, nodes=8 graph nodes,
    # in_feat=32, out_feat=32.
    B, N, in_feat, out_feat = 2, 8, 32, 32

    key = jax.random.PRNGKey(0)
    kx, ka_w, ka_b, ku_w, ku_b, kA = jax.random.split(key, 6)

    x = jax.random.normal(kx, (B, N, in_feat), dtype=jnp.float32)
    # nn.Linear shapes: weight [out, in], bias [out].
    wa = jax.random.normal(ka_w, (out_feat, in_feat), dtype=jnp.float32) * 0.1
    ba = jax.random.normal(ka_b, (out_feat,), dtype=jnp.float32) * 0.1
    wu = jax.random.normal(ku_w, (out_feat, in_feat), dtype=jnp.float32) * 0.1
    bu = jax.random.normal(ku_b, (out_feat,), dtype=jnp.float32) * 0.1
    # Adjacency A is an argument of forward() but unused by the computation.
    A = jax.random.uniform(kA, (B, N, N), dtype=jnp.float32)

    out = graph_conv_operation(A, x, wa, ba, wu, bu)
    out = jax.block_until_ready(out)

    ref = _reference(x, wa, ba, wu, bu)
    assert out.shape == (B, N, out_feat)
    assert jnp.allclose(out, ref, atol=1e-5, rtol=1e-5), "mismatch vs reference"

    print("KERNEL_OK")
</pallas_src>

<mosaic_0001>
module attributes {stable_mosaic.version = 11 : i64} {
  func.func @_gconv_kernel(%arg0: i32, %arg1: memref<8x32xf32, #tpu.memory_space<vmem>>, %arg2: memref<32x64xf32, #tpu.memory_space<vmem>>, %arg3: memref<1x64xf32, #tpu.memory_space<vmem>>, %arg4: memref<8x32xf32, #tpu.memory_space<vmem>>) attributes {dimension_semantics = [#tpu.dimension_semantics<parallel>], iteration_bounds = array<i64: 2>, scalar_prefetch = 0 : i64, scratch_operands = 0 : i64, tpu.core_type = #tpu.core_type<tc>, window_params = [{transform_indices = @transform_0, window_bounds = array<i64: 8, 32>}, {pipeline_mode = #tpu.pipeline_mode<synchronous>, transform_indices = @transform_1, window_bounds = array<i64: 32, 64>}, {pipeline_mode = #tpu.pipeline_mode<synchronous>, transform_indices = @transform_2, window_bounds = array<i64: 1, 64>}, {transform_indices = @transform_3, window_bounds = array<i64: 8, 32>}]} {
    %c0 = arith.constant 0 : index
    %c0_0 = arith.constant 0 : index
    %0 = vector.load %arg1[%c0, %c0_0] : memref<8x32xf32, #tpu.memory_space<vmem>>, vector<8x32xf32>
    %c0_1 = arith.constant 0 : index
    %c0_2 = arith.constant 0 : index
    %1 = vector.load %arg3[%c0_1, %c0_2] : memref<1x64xf32, #tpu.memory_space<vmem>>, vector<1x64xf32>
    %c0_3 = arith.constant 0 : index
    %c0_4 = arith.constant 0 : index
    %2 = vector.load %arg2[%c0_3, %c0_4] : memref<32x64xf32, #tpu.memory_space<vmem>>, vector<32x64xf32>
    %cst = arith.constant dense<0.000000e+00> : vector<8x64xf32>
    %3 = tpu.matmul %0, %2, %cst {dimension_numbers = #tpu.dot_dimension_numbers<[1], [0], [0], [1], [0, 0, 1, 1], [], []>} : vector<8x32xf32>, vector<32x64xf32>, vector<8x64xf32> -> vector<8x64xf32>
    %4 = vector.broadcast %1 : vector<1x64xf32> to vector<8x64xf32>
    %5 = arith.addf %3, %4 : vector<8x64xf32>
    %6 = vector.extract_strided_slice %5 {offsets = [0, 0], sizes = [8, 32], strides = [1, 1]} : vector<8x64xf32> to vector<8x32xf32>
    %7 = vector.extract_strided_slice %5 {offsets = [0, 32], sizes = [8, 32], strides = [1, 1]} : vector<8x64xf32> to vector<8x32xf32>
    %cst_5 = arith.constant 0.000000e+00 : f32
    %8 = vector.broadcast %cst_5 : f32 to vector<8x32xf32>
    %9 = arith.cmpf ogt, %6, %8 : vector<8x32xf32>
    %cst_6 = arith.constant 2.000000e-01 : f32
    %10 = vector.broadcast %cst_6 : f32 to vector<8x32xf32>
    %11 = arith.mulf %10, %6 : vector<8x32xf32>
    %12 = arith.select %9, %6, %11 : vector<8x32xi1>, vector<8x32xf32>
    %cst_7 = arith.constant 0.000000e+00 : f32
    %13 = vector.broadcast %cst_7 : f32 to vector<8x32xf32>
    %14 = arith.cmpf ogt, %7, %13 : vector<8x32xf32>
    %cst_8 = arith.constant 2.000000e-01 : f32
    %15 = vector.broadcast %cst_8 : f32 to vector<8x32xf32>
    %16 = arith.mulf %15, %7 : vector<8x32xf32>
    %17 = arith.select %14, %7, %16 : vector<8x32xi1>, vector<8x32xf32>
    %18 = arith.addf %12, %17 : vector<8x32xf32>
    %c0_9 = arith.constant 0 : index
    %c0_10 = arith.constant 0 : index
    %19 = vector.load %arg4[%c0_9, %c0_10] : memref<8x32xf32, #tpu.memory_space<vmem>>, vector<8x32xf32>
    tpu.vector_store %arg4[%c0_9, %c0_10], %18 {strides = array<i32>} : memref<8x32xf32, #tpu.memory_space<vmem>>, vector<8x32xf32>,
    return
  }
  func.func @transform_0(%arg0: i32) -> (i32, i32) {
    %c0_i32 = arith.constant 0 : i32
    %c0_i32_0 = arith.constant 0 : i32
    return %arg0, %c0_i32 : i32, i32
  }
  func.func @transform_1(%arg0: i32) -> (i32, i32) {
    %c0_i32 = arith.constant 0 : i32
    %c0_i32_0 = arith.constant 0 : i32
    %c0_i32_1 = arith.constant 0 : i32
    return %c0_i32, %c0_i32_0 : i32, i32
  }
  func.func @transform_2(%arg0: i32) -> (i32, i32) {
    %c0_i32 = arith.constant 0 : i32
    %c0_i32_0 = arith.constant 0 : i32
    %c0_i32_1 = arith.constant 0 : i32
    return %c0_i32, %c0_i32_0 : i32, i32
  }
  func.func @transform_3(%arg0: i32) -> (i32, i32) {
    %c0_i32 = arith.constant 0 : i32
    %c0_i32_0 = arith.constant 0 : i32
    return %arg0, %c0_i32 : i32, i32
  }
}

</mosaic_0001>

<llo_original>
// kernel: tpu_custom_call.1
$region0: #{tpu_custom_call.1}
  #allocation0 [shape = 'u32[]', space=smem, size = 0x4, offset = 0x4, fixed_abs, tag = 'smem constant byte address 0x4 - core index']
  #allocation1 [shape = 'u32[72,128]{1,0:T(1,128)}', space=vmem, size = 0x9000, scoped, tag = 'internal scratch']
  %s0 = inlined_call_operand.hbm [shape: f32[16,32], index: 0, kind: input, shape index: {}]
  %s1 = inlined_call_operand.hbm [shape: f32[32,64], index: 1, kind: input, shape index: {}]
  %s2 = inlined_call_operand.vmem [shape: f32[1,64], index: 2, kind: input, shape index: {}]
  %s3 = inlined_call_operand.hbm [shape: f32[16,32], index: 3, kind: output, shape index: {}]
  %s4 = sld [smem:[#allocation0]]
  $region53: #{tpu_custom_call.1} parent=0
    _
  %s6 = ssub.s32 1, %s4
  %s7 = scalar_select 0, %s6, %s4
  $region1: #{tpu_custom_call.1} parent=0
    #allocation2 [shape = 'u8[8192]{0}', space=vmem, size = 0x2000, scoped, tag = 'input window, operand 0']
    #allocation3 [shape = 's32[2]{0}', space=sflag, size = 0x8, scoped, tag = 'scoped memory for tpu_custom_call.1']
    #allocation4 [shape = 's32[2]{0}', space=sflag, size = 0x8, scoped, tag = 'scoped memory for tpu_custom_call.1']
    #allocation5 [shape = 'u8[16384]{0}', space=vmem, size = 0x4000, scoped, tag = 'input window, operand 1, single buffered']
    #allocation6 [shape = 's32[1]{0}', space=sflag, size = 0x4, scoped, tag = 'scoped memory for tpu_custom_call.1']
    #allocation7 [shape = 'u8[8192]{0}', space=vmem, size = 0x2000, scoped, tag = 'output window, operand 0']
    %8 = vsyncpa [#allocation3], 0
    %s9 = scalar_lea.sflag [#allocation3], 1
    %10 = vsyncpa %s9, 0
    %11 = vsyncpa [#allocation6], 0
    %12 = vsyncpa [#allocation4], 0
    %s13 = scalar_lea.sflag [#allocation4], 1
    %14 = vsyncpa %s13, 0
    loop: start=0, step=1, limit=4
    $region2: #{tpu_custom_call.1} parent=1 // loop_pre_header
      _
    $region3: #{tpu_custom_call.1} parent=1 // loop_header
      %s16 = sphi 0, %s20
      %p17 = scmp.ge.s32.totalorder %s16, 4
      %s26 = sphi 0, %s28
      %s29 = sphi 0, %s26
      %s30 = sphi 0, %s29
      %s46 = sphi 0, %s30
      %s50 = sphi 0, %s50
      %s52 = sphi 0, %s50
      %s53 = sphi 0, %s52
      %s67 = sphi 0, %s53
      %s71 = sphi 0, %s71
      %s73 = sphi 0, %s71
      %s74 = sphi 0, %s73
      %s88 = sphi 0, %s74
      %s94 = sphi 0, %s96
      %s97 = sphi 0, %s94
      %s98 = sphi 0, %s97
      %s114 = sphi 0, %s98
    $region4: #{tpu_custom_call.1} parent=1 // loop_header_branch
      %19 = sbr.rel (%p17) target = $region8
    $region5: #{tpu_custom_call.1} parent=1 // loop_body
      %s21 = ssub.s32 %s16, 1
      %s22 = ssub.s32 %s16, 2
      %s23 = sadd.s32 %s16, 1
      %s24 = ssub.s32 %s16, %s23
      %p25 = scmp.eq.s32.totalorder %s24, 0
      %s27 = sadd.s32 %s26, 1
      %s28 = scalar_select %p25, %s26, %s27
      %p31 = pneg %p25
      %p32 = scmp.eq.s32.totalorder %s16, 1
      %p33 = por %p31, %p32
      %p34 = scmp.ne.s32.totalorder %s26, %s29
      %p35 = scmp.eq.s32.totalorder %s16, 0
      %p36 = por %p34, %p35
      %p37 = scmp.ne.s32.totalorder %s26, %s29
      %p38 = scmp.eq.s32.totalorder %s21, 1
      %p39 = por %p37, %p38
      %p40 = scmp.ne.s32.totalorder %s29, %s30
      %p41 = scmp.eq.s32.totalorder %s21, 0
      %p42 = por %p40, %p41
      %p43 = scmp.ne.s32.totalorder %s29, %s30
      %p44 = scmp.eq.s32.totalorder %s22, 1
      %p45 = por %p43, %p44
      %p47 = scmp.ne.s32.totalorder %s30, %s46
      %p48 = scmp.eq.s32.totalorder %s22, 0
      %p49 = por %p47, %p48
      %s51 = sadd.s32 %s50, 1
      %p54 = scmp.eq.s32.totalorder %s16, 1
      %p55 = scmp.ne.s32.totalorder %s50, %s52
      %p56 = scmp.eq.s32.totalorder %s16, 0
      %p57 = por %p55, %p56
      %p58 = scmp.ne.s32.totalorder %s50, %s52
      %p59 = scmp.eq.s32.totalorder %s21, 1
      %p60 = por %p58, %p59
      %p61 = scmp.ne.s32.totalorder %s52, %s53
      %p62 = scmp.eq.s32.totalorder %s21, 0
      %p63 = por %p61, %p62
      %p64 = scmp.ne.s32.totalorder %s52, %s53
      %p65 = scmp.eq.s32.totalorder %s22, 1
      %p66 = por %p64, %p65
      %p68 = scmp.ne.s32.totalorder %s53, %s67
      %p69 = scmp.eq.s32.totalorder %s22, 0
      %p70 = por %p68, %p69
      %s72 = sadd.s32 %s71, 1
      %p75 = scmp.eq.s32.totalorder %s16, 1
      %p76 = scmp.ne.s32.totalorder %s71, %s73
      %p77 = scmp.eq.s32.totalorder %s16, 0
      %p78 = por %p76, %p77
      %p79 = scmp.ne.s32.totalorder %s71, %s73
      %p80 = scmp.eq.s32.totalorder %s21, 1
      %p81 = por %p79, %p80
      %p82 = scmp.ne.s32.totalorder %s73, %s74
      %p83 = scmp.eq.s32.totalorder %s21, 0
      %p84 = por %p82, %p83
      %p85 = scmp.ne.s32.totalorder %s73, %s74
      %p86 = scmp.eq.s32.totalorder %s22, 1
      %p87 = por %p85, %p86
      %p89 = scmp.ne.s32.totalorder %s74, %s88
      %p90 = scmp.eq.s32.totalorder %s22, 0
      %p91 = por %p89, %p90
      %s92 = ssub.s32 %s16, %s23
      %p93 = scmp.eq.s32.totalorder %s92, 0
      %s95 = sadd.s32 %s94, 1
      %s96 = scalar_select %p93, %s94, %s95
      %p99 = pneg %p93
      %p100 = scmp.eq.s32.totalorder %s16, 1
      %p101 = por %p99, %p100
      %p102 = scmp.ne.s32.totalorder %s94, %s97
      %p103 = scmp.eq.s32.totalorder %s16, 0
      %p104 = por %p102, %p103
      %p105 = scmp.ne.s32.totalorder %s94, %s97
      %p106 = scmp.eq.s32.totalorder %s21, 1
      %p107 = por %p105, %p106
      %p108 = scmp.ne.s32.totalorder %s97, %s98
      %p109 = scmp.eq.s32.totalorder %s21, 0
      %p110 = por %p108, %p109
      %p111 = scmp.ne.s32.totalorder %s97, %s98
      %p112 = scmp.eq.s32.totalorder %s22, 1
      %p113 = por %p111, %p112
      %p115 = scmp.ne.s32.totalorder %s98, %s114
      %p116 = scmp.eq.s32.totalorder %s22, 0
      %p117 = por %p115, %p116
      %p118 = scmp.le.s32.totalorder 1, %s16
      %p119 = scmp.lt.s32.totalorder %s16, 3
      %p120 = pnand %p118, %p119
      %p121 = pneg %p120
      // Predicated region
      $region9: #{tpu_custom_call.1} parent=5 // pred_check
        _
      $region10: #{tpu_custom_call.1} parent=5 // pred_check_branch
        %123 = sbr.rel (%p120) target = $region12
      $region11: #{tpu_custom_call.1} parent=5 // pred_region
        %s124 = ssub.s32 %s16, 1
        // Predicated region
        $region13: #{tpu_custom_call.1} parent=11 // pred_check
          %p125 = pneg %p63
        $region14: #{tpu_custom_call.1} parent=11 // pred_check_branch
          %127 = sbr.rel (%p125) target = $region16
        $region15: #{tpu_custom_call.1} parent=11 // pred_region
          %129 = vsyncadd [#allocation6], 0
          %s130 = sshll.u32 %s1, 4
          %s131 = int_to_ptr.hbm [resolvable:$true] %s130
          %s132 = sshll.u32 [#allocation5], 4
          %s133 = int_to_ptr.vmem [resolvable:$true] %s132
          %138 = dma.hbm_to_vmem [thread:$0]  %s131, 512, %s133, [#allocation6], 128, 128, 8
        $region16: #{tpu_custom_call.1} parent=11 // pred_fallthru
          _
        // Predicated region
        $region17: #{tpu_custom_call.1} parent=11 // pred_check
          %p139 = pneg %p84
        $region18: #{tpu_custom_call.1} parent=11 // pred_check_branch
          %141 = sbr.rel (%p139) target = $region20
        $region19: #{tpu_custom_call.1} parent=11 // pred_region
          _
        $region20: #{tpu_custom_call.1} parent=11 // pred_fallthru
          _
      $region12: #{tpu_custom_call.1} parent=5 // pred_fallthru
        _
      %p142 = scmp.lt.s32.totalorder %s16, 2
      // Predicated region
      $region21: #{tpu_custom_call.1} parent=5 // pred_check
        %p143 = pneg %p142
      $region22: #{tpu_custom_call.1} parent=5 // pred_check_branch
        %145 = sbr.rel (%p143) target = $region24
      $region23: #{tpu_custom_call.1} parent=5 // pred_region
        // Predicated region
        $region25: #{tpu_custom_call.1} parent=23 // pred_check
          %p146 = pneg %p36
        $region26: #{tpu_custom_call.1} parent=23 // pred_check_branch
          %148 = sbr.rel (%p146) target = $region28
        $region27: #{tpu_custom_call.1} parent=23 // pred_region
          %s149 = sand.u32 %s26, 1
          %s150 = scalar_lea.sflag [#allocation3], %s149
          %s151 = sand.u32 %s26, 1
          %s152 = smul.addr %s151, 8
          %s153 = scalar_lea.vmem [#allocation2], %s152
          %155 = vsyncadd %s150, 0
          %s156 = smul.addr %s16, 8
          %s157 = scalar_lea.hbm %s0, %s156
          %s159 = sshll.u32 %s157, 4
          %s160 = int_to_ptr.hbm [resolvable:$true] %s159
          %s161 = sshll.u32 %s153, 4
          %s162 = int_to_ptr.vmem [resolvable:$true] %s161
          %164 = dma.hbm_to_vmem [thread:$0]  %s160, 128, %s162, %s150
        $region28: #{tpu_custom_call.1} parent=23 // pred_fallthru
          _
      $region24: #{tpu_custom_call.1} parent=5 // pred_fallthru
        _
      %p165 = scmp.le.s32.totalorder 1, %s16
      %p166 = scmp.lt.s32.totalorder %s16, 3
      %p167 = pnand %p165, %p166
      %p168 = pneg %p167
      // Predicated region
      $region29: #{tpu_custom_call.1} parent=5 // pred_check
        _
      $region30: #{tpu_custom_call.1} parent=5 // pred_check_branch
        %170 = sbr.rel (%p167) target = $region32
      $region31: #{tpu_custom_call.1} parent=5 // pred_region
        %s171 = ssub.s32 %s16, 1
        %s172 = sand.u32 %s29, 1
        %s173 = scalar_lea.sflag [#allocation3], %s172
        %s174 = sand.u32 %s29, 1
        %s175 = smul.addr %s174, 8
        %s176 = scalar_lea.vmem [#allocation2], %s175
        // Predicated region
        $region33: #{tpu_custom_call.1} parent=31 // pred_check
          %p177 = pneg %p42
        $region34: #{tpu_custom_call.1} parent=31 // pred_check_branch
          %179 = sbr.rel (%p177) target = $region36
        $region35: #{tpu_custom_call.1} parent=31 // pred_region
          %181 = dma.done %s173, 128
        $region36: #{tpu_custom_call.1} parent=31 // pred_fallthru
          _
        // Predicated region
        $region37: #{tpu_custom_call.1} parent=31 // pred_check
          %p182 = pneg %p63
        $region38: #{tpu_custom_call.1} parent=31 // pred_check_branch
          %184 = sbr.rel (%p182) target = $region40
        $region39: #{tpu_custom_call.1} parent=31 // pred_region
          %186 = dma.done [#allocation6], 512
        $region40: #{tpu_custom_call.1} parent=31 // pred_fallthru
          _
        %s187 = sand.u32 %s29, 1
        %s188 = scalar_lea.sflag [#allocation3], %s187
        %s189 = sand.u32 %s29, 1
        %s190 = smul.addr %s189, 8
        %s191 = scalar_lea.vmem [#allocation2], %s190
        %p192 = pneg %p42
        %p193 = pneg %p39
        %p194 = pneg %p63
        %p195 = pneg %p60
        %p196 = pneg %p84
        %p197 = pneg %p81
        %p198 = pneg %p110
        %p199 = pneg %p107
        %s200 = sand.u32 %s97, 1
        %s201 = scalar_lea.sflag [#allocation4], %s200
        %s202 = sand.u32 %s97, 1
        %s203 = smul.addr %s202, 8
        %s204 = scalar_lea.vmem [#allocation7], %s203
        %v205 = vld [vmem:[%s176] sm:$0xff]
        %v206 = vld [vmem:[%s2] sm:$0x1]
        %v207 = vld [vmem:[#allocation5] sm:$0xff]
        %v208 = vld [vmem:[#allocation5 + $0x8] sm:$0xff]
        %v209 = vld [vmem:[#allocation5 + $0x10] sm:$0xff]
        %v210 = vld [vmem:[#allocation5 + $0x18] sm:$0xff]
        %v212 = vperm.slane %v206, 0
        %vm214 = vcmask 261120
        %v216 = vsel %vm214, %v205, 0
        %218 = vmatpush.msra.mxu0 0.0
        %219 = vmatpush.msra.mxu0 0.0
        %220 = vmatpush.msra.mxu0 0.0
        %221 = vmatpush.msra.mxu0 0.0
        %222 = vmatpush.msra.mxu0 0.0
        %223 = vmatpush.msra.mxu0 0.0
        %224 = vmatpush.msra.mxu0 0.0
        %225 = vmatpush.msra.mxu0 0.0
        %226 = vmatpush.msra.mxu0 0.0
        %227 = vmatpush.msra.mxu0 0.0
        %228 = vmatpush.msra.mxu0 0.0
        %229 = vmatpush.msra.mxu0 0.0
        %230 = vmatpush.msra.mxu0 %v210
        %231 = vmatpush.msra.mxu0 %v209
        %232 = vmatpush.msra.mxu0 %v208
        %233 = vmatpush.msra.mxu0 %v207
        %234 = vmatmul.f32.gmra.mxu0 %v216
        %v235 = vpop.f32.mrf.mxu0
        %v236 = vadd.f32 %v212, %v235
        %237 = vdwg.mxu0
        %vm238 = vcmp.gt.f32.partialorder %v236, 0.0
        %v239 = vmul.f32 %v236, 0.2
        %v240 = vsel %vm238, %v236, %v239
        %242 = vrot.lane.b32.xlu0 %v240, 96
        %v243 = vpop.permute.xlu0 %242
        %v245 = vadd.f32 %v240, %v243
        %246 = vst.msk [vmem:[%s204] sm:$0xff] %vm214, %v245
        %s247 = sand.u32 %s97, 1
        %s248 = scalar_lea.sflag [#allocation4], %s247
        %s249 = sand.u32 %s97, 1
        %s250 = smul.addr %s249, 8
        %s251 = scalar_lea.vmem [#allocation7], %s250
        // Predicated region
        $region41: #{tpu_custom_call.1} parent=31 // pred_check
          %p252 = pneg %p107
        $region42: #{tpu_custom_call.1} parent=31 // pred_check_branch
          %254 = sbr.rel (%p252) target = $region44
        $region43: #{tpu_custom_call.1} parent=31 // pred_region
          %256 = vsyncadd %s248, 0
          %s257 = smul.addr %s21, 8
          %s258 = scalar_lea.hbm %s3, %s257
          %s260 = sshll.u32 %s251, 4
          %s261 = int_to_ptr.vmem [resolvable:$true] %s260
          %s262 = sshll.u32 %s258, 4
          %s263 = int_to_ptr.hbm [resolvable:$true] %s262
          %265 = dma.vmem_to_hbm [thread:$0]  %s261, 128, %s263, %s248
        $region44: #{tpu_custom_call.1} parent=31 // pred_fallthru
          _
      $region32: #{tpu_custom_call.1} parent=5 // pred_fallthru
        _
      %p266 = scmp.le.s32.totalorder 2, %s16
      // Predicated region
      $region45: #{tpu_custom_call.1} parent=5 // pred_check
        %p267 = pneg %p266
      $region46: #{tpu_custom_call.1} parent=5 // pred_check_branch
        %269 = sbr.rel (%p267) target = $region48
      $region47: #{tpu_custom_call.1} parent=5 // pred_region
        %s270 = ssub.s32 %s16, 2
        // Predicated region
        $region49: #{tpu_custom_call.1} parent=47 // pred_check
          %p271 = pneg %p113
        $region50: #{tpu_custom_call.1} parent=47 // pred_check_branch
          %273 = sbr.rel (%p271) target = $region52
        $region51: #{tpu_custom_call.1} parent=47 // pred_region
          %s274 = sand.u32 %s98, 1
          %s275 = scalar_lea.sflag [#allocation4], %s274
          %s276 = sand.u32 %s98, 1
          %s277 = smul.addr %s276, 8
          %s278 = scalar_lea.vmem [#allocation7], %s277
          %280 = dma.done %s275, 128
        $region52: #{tpu_custom_call.1} parent=47 // pred_fallthru
          _
      $region48: #{tpu_custom_call.1} parent=5 // pred_fallthru
        _
    $region6: #{tpu_custom_call.1} parent=1 // loop_footer
      %s20 = sadd.s32 1, %s16
    $region7: #{tpu_custom_call.1} parent=1 // loop_footer_branch
      %15 = sbr.rel target = $region3
    $region8: #{tpu_custom_call.1} parent=1 // loop_exit
      _
    %281 = vsyncpa [#allocation3], 1
    %s282 = scalar_lea.sflag [#allocation3], 1
    %283 = vsyncpa %s282, 1
    %284 = vsyncpa [#allocation6], 1
    %285 = vsyncpa [#allocation4], 1
    %s286 = scalar_lea.sflag [#allocation4], 1
    %287 = vsyncpa %s286, 1

</llo_original>
